<compile_context>
chip_gen: v7x
topology: tpu7x:2x2x1
jax: 0.10.0
libtpu: 0.0.40
codegen_flags: <defaults>
</compile_context>

<pallas_src>
import math

import jax
import jax.numpy as jnp
from jax.experimental import pallas as pl
from jax.experimental.pallas import tpu as pltpu


# ----------------------------- config ---------------------------------------
BATCH       = 2
IN_C, H, W  = 1, 32, 32            # small stand-in for (1, 224, 224) input
RESNET_DIM  = 64
CVT_DIM     = 96
SWIN_DIM    = 80
EMBED_DIM   = 32                   # small stand-in for embed_dim=256
NUM_CLASSES = 3
FINAL_DIM   = EMBED_DIM * 3        # FCBW strategy: 96

FLAT_DIM    = IN_C * H * W         # 1024 (lane-aligned)
FUSED_DIM   = RESNET_DIM + CVT_DIM + SWIN_DIM   # 240
FUSED_PAD   = 256                  # 240 -> 256 lanes
PROJ_PAD    = 128                  # 96  -> 128 lanes (also classifier width)
HID1, HID2  = 128, 64
MPAD        = 8                    # batch padded to f32 sublane tile


def _gelu_exact(x):
    # PyTorch nn.GELU() default = exact erf-based GELU (kept in f32).
    return 0.5 * x * (1.0 + jax.lax.erf(x / jnp.sqrt(2.0).astype(x.dtype)))


# --------------------------- Pallas kernel ----------------------------------
def _stroke_kernel(xf_ref, wb_ref, wp_ref, wcls_ref, sm_ref, out_ref):
    """Fused backbone-stubs + FCBW fusion + classifier MLP.

    xf_ref  : (8, 1024)  bf16   flattened, batch-padded input
    wb_ref  : (1024,256) bf16   concatenated backbone-stub weights (zero-pad)
    wp_ref  : (256, 128) f32    block-diagonal projection (alpha-free)
    wcls_ref: (128, 384) f32    [w1 | w2 | w3] lane-concatenated, zero-padded
    sm_ref  : (8, 256)   f32    row0 bb, row1 bp, row2 b1, row3 b2, row4 b3,
                                row5 softmax(bw) lane-replicated multiplier
    out_ref : (8, 128)   f32    lane-dense logits slab (cols 3: are zero)
    """
    f32 = jnp.float32

    # ---- fused backbone stubs: relu(x @ [Wbr|Wbc|Wbs] + [bbr|bbc|bbs]) ------
    # bf16 operands -> native MXU rate, f32 accumulation.
    feats = jnp.maximum(
        jnp.dot(xf_ref[...], wb_ref[...], preferred_element_type=f32)
        + sm_ref[0:1, :], 0.0)                                   # (8, 256) f32

    # ---- FCBW fusion: block-diag projection, then softmax(bw) multiplier ----
    # Equivalent to cat([a0*(rf@Wr+br), a1*(cf@Wc+bc), a2*(sf@Ws+bs)], dim=1).
    comb = ((jnp.dot(feats, wp_ref[...], preferred_element_type=f32)
             + sm_ref[1:2, 0:128])
            * sm_ref[5:6, 0:128])                                # (8, 128)

    # ---- classifier: (Dropout=id) Linear->GELU->(Dropout=id)->Linear->GELU->Linear
    h = _gelu_exact(jnp.dot(comb, wcls_ref[:, 0:128],
                            preferred_element_type=f32) + sm_ref[2:3, 0:128])
    h = _gelu_exact(jnp.dot(h, wcls_ref[:, 128:256],
                            preferred_element_type=f32) + sm_ref[3:4, 0:128])
    out_ref[...] = (jnp.dot(h, wcls_ref[:, 256:384],
                            preferred_element_type=f32) + sm_ref[4:5, 0:128])


# ---------------------- one-time parameter packing ---------------------------
def pack_params(p):
    """Hoisted out of the per-call path: runs once at parameter-prep time."""
    # fused backbone-stub weights, padded 240 -> 256 lanes, bf16 for the MXU.
    wb = jnp.concatenate([p["wbr"], p["wbc"], p["wbs"]], axis=1)        # (1024, 240)
    wb = jnp.pad(wb, ((0, 0), (0, FUSED_PAD - FUSED_DIM)))              # (1024, 256)
    wb = wb.astype(jnp.bfloat16)

    # block-diagonal projection, ALPHA-FREE (alpha applied in-kernel).
    wp = jnp.zeros((FUSED_PAD, PROJ_PAD), jnp.float32)
    wp = wp.at[0:RESNET_DIM, 0:EMBED_DIM].set(p["wr"])
    wp = wp.at[RESNET_DIM:RESNET_DIM + CVT_DIM,
               EMBED_DIM:2 * EMBED_DIM].set(p["wc"])
    wp = wp.at[RESNET_DIM + CVT_DIM:FUSED_DIM,
               2 * EMBED_DIM:3 * EMBED_DIM].set(p["ws"])

    # classifier weights padded to 128-dense shapes, lane-concatenated.
    w1 = jnp.pad(p["w1"], ((0, PROJ_PAD - FINAL_DIM), (0, 0)))          # (128, 128)
    w2 = jnp.pad(p["w2"], ((0, 0), (0, PROJ_PAD - HID2)))               # (128, 128)
    w3 = jnp.pad(p["w3"], ((0, PROJ_PAD - HID2),
                           (0, PROJ_PAD - NUM_CLASSES)))                # (128, 128)
    wcls = jnp.concatenate([w1, w2, w3], axis=1)                        # (128, 384)

    # packed biases (alpha-free); row 5 is filled with softmax(bw) at runtime.
    bb = jnp.concatenate([p["bbr"], p["bbc"], p["bbs"]], axis=1)        # (1, 240)
    bp = jnp.concatenate([p["br"], p["bc"], p["bs"]], axis=1)           # (1, 96)
    smalls = jnp.zeros((8, FUSED_PAD), jnp.float32)
    smalls = smalls.at[0, :FUSED_DIM].set(bb[0])
    smalls = smalls.at[1, :FINAL_DIM].set(bp[0])
    smalls = smalls.at[2, :HID1].set(p["b1"][0])
    smalls = smalls.at[3, :HID2].set(p["b2"][0])
    smalls = smalls.at[4, :NUM_CLASSES].set(p["b3"][0])

    return {"wb": wb, "wp": wp, "wcls": wcls, "smalls": smalls}


# ------------------------------ wrapper --------------------------------------
@jax.jit
def stroke_detector_forward(x, bw, packed):
    B = x.shape[0]
    # flatten, cast to bf16 for the big GEMM, pad batch to the sublane tile.
    xf = x.reshape(B, -1).astype(jnp.bfloat16)                          # (B, 1024)
    xf = jnp.pad(xf, ((0, MPAD - B), (0, 0)))                           # (8, 1024)

    # softmax over the 3 backbone weights -> (1,128) lane-replicated multiplier
    # (a0 on cols 0:32, a1 on 32:64, a2 on 64:96, 0 elsewhere).
    alpha = jax.nn.softmax(bw.reshape(-1))                              # (3,)
    alpha_row = jnp.pad(jnp.repeat(alpha, EMBED_DIM),
                        (0, PROJ_PAD - FINAL_DIM))                      # (128,)
    smalls = packed["smalls"].at[5, :PROJ_PAD].set(alpha_row)           # (8, 256)

    flops = 2 * MPAD * (FLAT_DIM * FUSED_PAD + FUSED_PAD * PROJ_PAD
                        + 3 * PROJ_PAD * PROJ_PAD)
    bytes_accessed = (MPAD * FLAT_DIM * 2 + FLAT_DIM * FUSED_PAD * 2
                      + FUSED_PAD * PROJ_PAD * 4 + PROJ_PAD * 384 * 4
                      + 8 * FUSED_PAD * 4 + MPAD * PROJ_PAD * 4)

    vmem = pl.BlockSpec(memory_space=pltpu.MemorySpace.VMEM)
    out_pad = pl.pallas_call(
        _stroke_kernel,
        out_shape=jax.ShapeDtypeStruct((MPAD, PROJ_PAD), jnp.float32),
        in_specs=[vmem] * 5,
        out_specs=vmem,
        cost_estimate=pl.CostEstimate(flops=flops,
                                      transcendentals=2 * MPAD * PROJ_PAD,
                                      bytes_accessed=bytes_accessed),
    )(xf, packed["wb"], packed["wp"], packed["wcls"], smalls)
    return out_pad[:B, :NUM_CLASSES]


# ------------------------ backbone stubs (plain JAX) -------------------------
# TODO(synk): the real ResNet / CvT / SWIN feature extractors are external
# pretrained models with no definition in this module; they are stood in for by
# deterministic flatten+linear+relu extractors producing the same (B, feat_dim)
# feature interface that the fusion head consumes.
def backbone_features(x, wb, bb):
    xf = x.reshape(x.shape[0], -1)                      # NCHW -> (B, C*H*W)
    return jax.nn.relu(xf @ wb + bb)


# --------------------------- parameter setup ---------------------------------
def init_params(key):
    def lin(k, fan_in, fan_out):
        # deterministic uniform init similar to nn.Linear default
        k1, k2 = jax.random.split(k)
        bound = 1.0 / math.sqrt(fan_in)
        w = jax.random.uniform(k1, (fan_in, fan_out), jnp.float32, -bound, bound)
        b = jax.random.uniform(k2, (1, fan_out), jnp.float32, -bound, bound)
        return w, b

    keys = jax.random.split(key, 8)
    p = {}
    # backbone stubs
    p["wbr"], p["bbr"] = lin(keys[0], FLAT_DIM, RESNET_DIM)
    p["wbc"], p["bbc"] = lin(keys[1], FLAT_DIM, CVT_DIM)
    p["wbs"], p["bbs"] = lin(keys[2], FLAT_DIM, SWIN_DIM)
    # projections
    p["wr"], p["br"] = lin(keys[3], RESNET_DIM, EMBED_DIM)
    p["wc"], p["bc"] = lin(keys[4], CVT_DIM, EMBED_DIM)
    p["ws"], p["bs"] = lin(keys[5], SWIN_DIM, EMBED_DIM)
    # backbone_weights = ones(3,1)/3, stored as (1,3)
    p["bw"] = jnp.full((1, 3), 1.0 / 3.0, jnp.float32)
    # classifier
    p["w1"], p["b1"] = lin(keys[6], FINAL_DIM, HID1)
    k7a, k7b = jax.random.split(keys[7])
    p["w2"], p["b2"] = lin(k7a, HID1, HID2)
    p["w3"], p["b3"] = lin(k7b, HID2, NUM_CLASSES)
    return p


# ------------------------------ reference ------------------------------------
def reference_forward(x, p):
    rf = backbone_features(x, p["wbr"], p["bbr"])
    cf = backbone_features(x, p["wbc"], p["bbc"])
    sf = backbone_features(x, p["wbs"], p["bbs"])
    alpha = jax.nn.softmax(p["bw"], axis=-1)
    r = (rf @ p["wr"] + p["br"]) * alpha[0, 0]
    c = (cf @ p["wc"] + p["bc"]) * alpha[0, 1]
    s = (sf @ p["ws"] + p["bs"]) * alpha[0, 2]
    comb = jnp.concatenate([r, c, s], axis=1)
    h = _gelu_exact(comb @ p["w1"] + p["b1"])
    h = _gelu_exact(h @ p["w2"] + p["b2"])
    return h @ p["w3"] + p["b3"]


# --------------------------------- main ---------------------------------------
if __name__ == "__main__":
    key = jax.random.PRNGKey(0)
    kx, kp = jax.random.split(key)
    x = jax.random.normal(kx, (BATCH, IN_C, H, W), jnp.float32)   # NCHW input
    params = init_params(kp)

    packed = pack_params(params)                                  # one-time repack
    packed = jax.tree_util.tree_map(jax.block_until_ready, packed)

    out = stroke_detector_forward(x, params["bw"], packed)
    out = jax.block_until_ready(out)

    ref = jax.block_until_ready(reference_forward(x, params))
    assert out.shape == (BATCH, NUM_CLASSES), out.shape
    # bf16 operands on the K=1024 backbone GEMM (f32 accumulation) bound the
    # error to ~0.2-0.5% relative / ~1e-4 absolute at these magnitudes.
    assert jnp.allclose(out, ref, rtol=1e-2, atol=2e-3), (out, ref)

    print("KERNEL_OK")
</pallas_src>

<mosaic_0001>
module attributes {stable_mosaic.version = 11 : i64} {
  func.func @_stroke_kernel(%arg0: memref<8x1024xbf16, #tpu.memory_space<vmem>>, %arg1: memref<1024x256xbf16, #tpu.memory_space<vmem>>, %arg2: memref<256x128xf32, #tpu.memory_space<vmem>>, %arg3: memref<128x384xf32, #tpu.memory_space<vmem>>, %arg4: memref<8x256xf32, #tpu.memory_space<vmem>>, %arg5: memref<8x128xf32, #tpu.memory_space<vmem>>) attributes {dimension_semantics = [], scalar_prefetch = 0 : i64, scratch_operands = 0 : i64, tpu.core_type = #tpu.core_type<tc>} {
    %c0 = arith.constant 0 : index
    %c0_0 = arith.constant 0 : index
    %0 = vector.load %arg0[%c0, %c0_0] : memref<8x1024xbf16, #tpu.memory_space<vmem>>, vector<8x1024xbf16>
    %c0_1 = arith.constant 0 : index
    %c0_2 = arith.constant 0 : index
    %1 = vector.load %arg1[%c0_1, %c0_2] : memref<1024x256xbf16, #tpu.memory_space<vmem>>, vector<1024x256xbf16>
    %cst = arith.constant dense<0.000000e+00> : vector<8x256xf32>
    %2 = tpu.matmul %0, %1, %cst {dimension_numbers = #tpu.dot_dimension_numbers<[1], [0], [0], [1], [0, 0, 1, 1], [], []>} : vector<8x1024xbf16>, vector<1024x256xbf16>, vector<8x256xf32> -> vector<8x256xf32>
    %c0_3 = arith.constant 0 : index
    %c0_4 = arith.constant 0 : index
    %3 = vector.load %arg4[%c0_3, %c0_4] : memref<8x256xf32, #tpu.memory_space<vmem>>, vector<1x256xf32>
    %4 = vector.broadcast %3 : vector<1x256xf32> to vector<8x256xf32>
    %5 = arith.addf %2, %4 : vector<8x256xf32>
    %cst_5 = arith.constant 0.000000e+00 : f32
    %6 = vector.broadcast %cst_5 : f32 to vector<8x256xf32>
    %7 = arith.maximumf %5, %6 : vector<8x256xf32>
    %c0_6 = arith.constant 0 : index
    %c0_7 = arith.constant 0 : index
    %8 = vector.load %arg2[%c0_6, %c0_7] : memref<256x128xf32, #tpu.memory_space<vmem>>, vector<256x128xf32>
    %cst_8 = arith.constant dense<0.000000e+00> : vector<8x128xf32>
    %9 = tpu.matmul %7, %8, %cst_8 {dimension_numbers = #tpu.dot_dimension_numbers<[1], [0], [0], [1], [0, 0, 1, 1], [], []>} : vector<8x256xf32>, vector<256x128xf32>, vector<8x128xf32> -> vector<8x128xf32>
    %c1 = arith.constant 1 : index
    %c0_9 = arith.constant 0 : index
    %10 = vector.load %arg4[%c1, %c0_9] : memref<8x256xf32, #tpu.memory_space<vmem>>, vector<1x128xf32>
    %11 = vector.broadcast %10 : vector<1x128xf32> to vector<8x128xf32>
    %12 = arith.addf %9, %11 : vector<8x128xf32>
    %c5 = arith.constant 5 : index
    %c0_10 = arith.constant 0 : index
    %13 = vector.load %arg4[%c5, %c0_10] : memref<8x256xf32, #tpu.memory_space<vmem>>, vector<1x128xf32>
    %14 = vector.broadcast %13 : vector<1x128xf32> to vector<8x128xf32>
    %15 = arith.mulf %12, %14 : vector<8x128xf32>
    %c0_11 = arith.constant 0 : index
    %c0_12 = arith.constant 0 : index
    %16 = vector.load %arg3[%c0_11, %c0_12] : memref<128x384xf32, #tpu.memory_space<vmem>>, vector<128x128xf32>
    %cst_13 = arith.constant dense<0.000000e+00> : vector<8x128xf32>
    %17 = tpu.matmul %15, %16, %cst_13 {dimension_numbers = #tpu.dot_dimension_numbers<[1], [0], [0], [1], [0, 0, 1, 1], [], []>} : vector<8x128xf32>, vector<128x128xf32>, vector<8x128xf32> -> vector<8x128xf32>
    %c2 = arith.constant 2 : index
    %c0_14 = arith.constant 0 : index
    %18 = vector.load %arg4[%c2, %c0_14] : memref<8x256xf32, #tpu.memory_space<vmem>>, vector<1x128xf32>
    %19 = vector.broadcast %18 : vector<1x128xf32> to vector<8x128xf32>
    %20 = arith.addf %17, %19 : vector<8x128xf32>
    %cst_15 = arith.constant 5.000000e-01 : f32
    %21 = vector.broadcast %cst_15 : f32 to vector<8x128xf32>
    %22 = arith.mulf %21, %20 : vector<8x128xf32>
    %cst_16 = arith.constant 2.000000e+00 : f32
    %23 = math.sqrt %cst_16 : f32
    %24 = vector.broadcast %23 : f32 to vector<8x128xf32>
    %25 = arith.divf %20, %24 : vector<8x128xf32>
    %26 = math.erf %25 : vector<8x128xf32>
    %cst_17 = arith.constant 1.000000e+00 : f32
    %27 = vector.broadcast %cst_17 : f32 to vector<8x128xf32>
    %28 = arith.addf %27, %26 : vector<8x128xf32>
    %29 = arith.mulf %22, %28 : vector<8x128xf32>
    %c0_18 = arith.constant 0 : index
    %c128 = arith.constant 128 : index
    %30 = vector.load %arg3[%c0_18, %c128] : memref<128x384xf32, #tpu.memory_space<vmem>>, vector<128x128xf32>
    %cst_19 = arith.constant dense<0.000000e+00> : vector<8x128xf32>
    %31 = tpu.matmul %29, %30, %cst_19 {dimension_numbers = #tpu.dot_dimension_numbers<[1], [0], [0], [1], [0, 0, 1, 1], [], []>} : vector<8x128xf32>, vector<128x128xf32>, vector<8x128xf32> -> vector<8x128xf32>
    %c3 = arith.constant 3 : index
    %c0_20 = arith.constant 0 : index
    %32 = vector.load %arg4[%c3, %c0_20] : memref<8x256xf32, #tpu.memory_space<vmem>>, vector<1x128xf32>
    %33 = vector.broadcast %32 : vector<1x128xf32> to vector<8x128xf32>
    %34 = arith.addf %31, %33 : vector<8x128xf32>
    %cst_21 = arith.constant 5.000000e-01 : f32
    %35 = vector.broadcast %cst_21 : f32 to vector<8x128xf32>
    %36 = arith.mulf %35, %34 : vector<8x128xf32>
    %cst_22 = arith.constant 2.000000e+00 : f32
    %37 = math.sqrt %cst_22 : f32
    %38 = vector.broadcast %37 : f32 to vector<8x128xf32>
    %39 = arith.divf %34, %38 : vector<8x128xf32>
    %40 = math.erf %39 : vector<8x128xf32>
    %cst_23 = arith.constant 1.000000e+00 : f32
    %41 = vector.broadcast %cst_23 : f32 to vector<8x128xf32>
    %42 = arith.addf %41, %40 : vector<8x128xf32>
    %43 = arith.mulf %36, %42 : vector<8x128xf32>
    %c0_24 = arith.constant 0 : index
    %c256 = arith.constant 256 : index
    %44 = vector.load %arg3[%c0_24, %c256] : memref<128x384xf32, #tpu.memory_space<vmem>>, vector<128x128xf32>
    %cst_25 = arith.constant dense<0.000000e+00> : vector<8x128xf32>
    %45 = tpu.matmul %43, %44, %cst_25 {dimension_numbers = #tpu.dot_dimension_numbers<[1], [0], [0], [1], [0, 0, 1, 1], [], []>} : vector<8x128xf32>, vector<128x128xf32>, vector<8x128xf32> -> vector<8x128xf32>
    %c4 = arith.constant 4 : index
    %c0_26 = arith.constant 0 : index
    %46 = vector.load %arg4[%c4, %c0_26] : memref<8x256xf32, #tpu.memory_space<vmem>>, vector<1x128xf32>
    %47 = vector.broadcast %46 : vector<1x128xf32> to vector<8x128xf32>
    %48 = arith.addf %45, %47 : vector<8x128xf32>
    %c0_27 = arith.constant 0 : index
    %c0_28 = arith.constant 0 : index
    %49 = vector.load %arg5[%c0_27, %c0_28] : memref<8x128xf32, #tpu.memory_space<vmem>>, vector<8x128xf32>
    tpu.vector_store %arg5[%c0_27, %c0_28], %48 {strides = array<i32>} : memref<8x128xf32, #tpu.memory_space<vmem>>, vector<8x128xf32>,
    return
  }
}

</mosaic_0001>

<llo_original>
// kernel: stroke_detector_forward.1
$region0: #{stroke_detector_forward.1}
  #allocation0 [shape = 'u32[]', space=smem, size = 0x4, offset = 0x4, fixed_abs, tag = 'smem constant byte address 0x4 - core index']
  #allocation1 [shape = 'u32[144,128]{1,0:T(1,128)}', space=vmem, size = 0x12000, scoped, tag = 'internal scratch']
  %s0 = inlined_call_operand.vmem [shape: bf16[8,1024], index: 0, kind: input, shape index: {}]
  %s1 = inlined_call_operand.hbm [shape: bf16[1024,256], index: 1, kind: input, shape index: {}]
  %s2 = inlined_call_operand.hbm [shape: f32[256,128], index: 2, kind: input, shape index: {}]
  %s3 = inlined_call_operand.hbm [shape: f32[128,384], index: 3, kind: input, shape index: {}]
  %s4 = inlined_call_operand.vmem [shape: f32[8,256], index: 4, kind: input, shape index: {}]
  %s5 = inlined_call_operand.vmem [shape: f32[8,128], index: 5, kind: output, shape index: {}]
  %s6 = sld [smem:[#allocation0]]
  $region42: #{stroke_detector_forward.1} parent=0
    _
  %s8 = ssub.s32 1, %s6
  %s9 = scalar_select 0, %s8, %s6
  $region1: #{stroke_detector_forward.1} parent=0
    #allocation2 [shape = 'u8[524288]{0}', space=vmem, size = 0x80000, scoped, tag = 'input window, operand 1, single buffered']
    #allocation3 [shape = 's32[1]{0}', space=sflag, size = 0x4, scoped, tag = 'scoped memory for stroke_detector_forward.1']
    #allocation4 [shape = 'u8[131072]{0}', space=vmem, size = 0x20000, scoped, tag = 'input window, operand 2, single buffered']
    #allocation5 [shape = 's32[1]{0}', space=sflag, size = 0x4, scoped, tag = 'scoped memory for stroke_detector_forward.1']
    #allocation6 [shape = 'u8[196608]{0}', space=vmem, size = 0x30000, scoped, tag = 'input window, operand 3, single buffered']
    %10 = vsyncpa [#allocation3], 0
    %11 = vsyncpa [#allocation5], 0
    // Predicated region
    $region2: #{stroke_detector_forward.1} parent=1 // pred_check
      _
    $region3: #{stroke_detector_forward.1} parent=1 // pred_check_branch
      %13 = sbr.rel (0) target = $region5
    $region4: #{stroke_detector_forward.1} parent=1 // pred_region
      _
    $region5: #{stroke_detector_forward.1} parent=1 // pred_fallthru
      _
    // Predicated region
    $region6: #{stroke_detector_forward.1} parent=1 // pred_check
      _
    $region7: #{stroke_detector_forward.1} parent=1 // pred_check_branch
      %15 = sbr.rel (0) target = $region9
    $region8: #{stroke_detector_forward.1} parent=1 // pred_region
      %s17 = ssub.s32 16384, 16384
      %18 = vsyncadd [#allocation3], %s17
      %s19 = sshll.u32 [#allocation2], 4
      %s20 = int_to_ptr.vmem [resolvable:$true] %s19
      %25 = dma.hbm_to_vmem [thread:$0]  %s1, 16384, %s20, [#allocation3], 128, 128, 8
    $region9: #{stroke_detector_forward.1} parent=1 // pred_fallthru
      _
    // Predicated region
    $region10: #{stroke_detector_forward.1} parent=1 // pred_check
      _
    $region11: #{stroke_detector_forward.1} parent=1 // pred_check_branch
      %27 = sbr.rel (0) target = $region13
    $region12: #{stroke_detector_forward.1} parent=1 // pred_region
      %s29 = ssub.s32 4096, 4096
      %30 = vsyncadd [#allocation5], %s29
      %s31 = sshll.u32 [#allocation4], 4
      %s32 = int_to_ptr.vmem [resolvable:$true] %s31
      %37 = dma.hbm_to_vmem [thread:$0]  %s2, 4096, %s32, [#allocation5], 128, 128, 8
    $region13: #{stroke_detector_forward.1} parent=1 // pred_fallthru
      _
    // Predicated region
    $region14: #{stroke_detector_forward.1} parent=1 // pred_check
      _
    $region15: #{stroke_detector_forward.1} parent=1 // pred_check_branch
      %39 = sbr.rel (0) target = $region17
    $region16: #{stroke_detector_forward.1} parent=1 // pred_region
      %s41 = ssub.s32 6144, 6144
      %42 = vsyncadd [#allocation5], %s41
      %s43 = sshll.u32 [#allocation6], 4
      %s44 = int_to_ptr.vmem [resolvable:$true] %s43
      %49 = dma.hbm_to_vmem [thread:$0]  %s3, 6144, %s44, [#allocation5], 384, 384, 24
    $region17: #{stroke_detector_forward.1} parent=1 // pred_fallthru
      _
    // Predicated region
    $region18: #{stroke_detector_forward.1} parent=1 // pred_check
      _
    $region19: #{stroke_detector_forward.1} parent=1 // pred_check_branch
      %51 = sbr.rel (0) target = $region21
    $region20: #{stroke_detector_forward.1} parent=1 // pred_region
      _
    $region21: #{stroke_detector_forward.1} parent=1 // pred_fallthru
      _
    // Predicated region
    $region22: #{stroke_detector_forward.1} parent=1 // pred_check
      _
    $region23: #{stroke_detector_forward.1} parent=1 // pred_check_branch
      %53 = sbr.rel (0) target = $region25
    $region24: #{stroke_detector_forward.1} parent=1 // pred_region
      %54 = dma.done [#allocation3], 16384
    $region25: #{stroke_detector_forward.1} parent=1 // pred_fallthru
      _
    // Predicated region
    $region26: #{stroke_detector_forward.1} parent=1 // pred_check
      _
    $region27: #{stroke_detector_forward.1} parent=1 // pred_check_branch
      %56 = sbr.rel (0) target = $region29
    $region28: #{stroke_detector_forward.1} parent=1 // pred_region
      %57 = dma.done [#allocation5], 4096
    $region29: #{stroke_detector_forward.1} parent=1 // pred_fallthru
      _
    // Predicated region
    $region30: #{stroke_detector_forward.1} parent=1 // pred_check
      _
    $region31: #{stroke_detector_forward.1} parent=1 // pred_check_branch
      %59 = sbr.rel (0) target = $region33
    $region32: #{stroke_detector_forward.1} parent=1 // pred_region
      %60 = dma.done [#allocation5], 6144
    $region33: #{stroke_detector_forward.1} parent=1 // pred_fallthru
      _
    %v61 = vld [vmem:[%s0] sm:$0xff]
    %v62 = vld [vmem:[%s0 + $0x8] sm:$0xff]
    %v63 = vld [vmem:[%s0 + $0x10] sm:$0xff]
    %v64 = vld [vmem:[%s0 + $0x18] sm:$0xff]
    %v65 = vld [vmem:[#allocation2] sm:$0xff]
    %v66 = vld [vmem:[#allocation2 + $0x8] sm:$0xff]
    %v67 = vld [vmem:[#allocation2 + $0x10] sm:$0xff]
    %v68 = vld [vmem:[#allocation2 + $0x18] sm:$0xff]
    %v69 = vld [vmem:[#allocation2 + $0x20] sm:$0xff]
    %v70 = vld [vmem:[#allocation2 + $0x28] sm:$0xff]
    %v71 = vld [vmem:[#allocation2 + $0x30] sm:$0xff]
    %v72 = vld [vmem:[#allocation2 + $0x38] sm:$0xff]
    %v73 = vld [vmem:[#allocation2 + $0x40] sm:$0xff]
    %v74 = vld [vmem:[#allocation2 + $0x48] sm:$0xff]
    %v75 = vld [vmem:[#allocation2 + $0x50] sm:$0xff]
    %v76 = vld [vmem:[#allocation2 + $0x58] sm:$0xff]
    %v77 = vld [vmem:[#allocation2 + $0x60] sm:$0xff]
    %v78 = vld [vmem:[#allocation2 + $0x68] sm:$0xff]
    %v79 = vld [vmem:[#allocation2 + $0x70] sm:$0xff]
    %v80 = vld [vmem:[#allocation2 + $0x78] sm:$0xff]
    %v81 = vld [vmem:[#allocation2 + $0x80] sm:$0xff]
    %v82 = vld [vmem:[#allocation2 + $0x88] sm:$0xff]
    %v83 = vld [vmem:[#allocation2 + $0x90] sm:$0xff]
    %v84 = vld [vmem:[#allocation2 + $0x98] sm:$0xff]
    %v85 = vld [vmem:[#allocation2 + $0xa0] sm:$0xff]
    %v86 = vld [vmem:[#allocation2 + $0xa8] sm:$0xff]
    %v87 = vld [vmem:[#allocation2 + $0xb0] sm:$0xff]
    %v88 = vld [vmem:[#allocation2 + $0xb8] sm:$0xff]
    %v89 = vld [vmem:[#allocation2 + $0xc0] sm:$0xff]
    %v90 = vld [vmem:[#allocation2 + $0xc8] sm:$0xff]
    %v91 = vld [vmem:[#allocation2 + $0xd0] sm:$0xff]
    %v92 = vld [vmem:[#allocation2 + $0xd8] sm:$0xff]
    %v93 = vld [vmem:[#allocation2 + $0xe0] sm:$0xff]
    %v94 = vld [vmem:[#allocation2 + $0xe8] sm:$0xff]
    %v95 = vld [vmem:[#allocation2 + $0xf0] sm:$0xff]
    %v96 = vld [vmem:[#allocation2 + $0xf8] sm:$0xff]
    %v97 = vld [vmem:[#allocation2 + $0x100] sm:$0xff]
    %v98 = vld [vmem:[#allocation2 + $0x108] sm:$0xff]
    %v99 = vld [vmem:[#allocation2 + $0x110] sm:$0xff]
    %v100 = vld [vmem:[#allocation2 + $0x118] sm:$0xff]
    %v101 = vld [vmem:[#allocation2 + $0x120] sm:$0xff]
    %v102 = vld [vmem:[#allocation2 + $0x128] sm:$0xff]
    %v103 = vld [vmem:[#allocation2 + $0x130] sm:$0xff]
    %v104 = vld [vmem:[#allocation2 + $0x138] sm:$0xff]
    %v105 = vld [vmem:[#allocation2 + $0x140] sm:$0xff]
    %v106 = vld [vmem:[#allocation2 + $0x148] sm:$0xff]
    %v107 = vld [vmem:[#allocation2 + $0x150] sm:$0xff]
    %v108 = vld [vmem:[#allocation2 + $0x158] sm:$0xff]
    %v109 = vld [vmem:[#allocation2 + $0x160] sm:$0xff]
    %v110 = vld [vmem:[#allocation2 + $0x168] sm:$0xff]
    %v111 = vld [vmem:[#allocation2 + $0x170] sm:$0xff]
    %v112 = vld [vmem:[#allocation2 + $0x178] sm:$0xff]
    %v113 = vld [vmem:[#allocation2 + $0x180] sm:$0xff]
    %v114 = vld [vmem:[#allocation2 + $0x188] sm:$0xff]
    %v115 = vld [vmem:[#allocation2 + $0x190] sm:$0xff]
    %v116 = vld [vmem:[#allocation2 + $0x198] sm:$0xff]
    %v117 = vld [vmem:[#allocation2 + $0x1a0] sm:$0xff]
    %v118 = vld [vmem:[#allocation2 + $0x1a8] sm:$0xff]
    %v119 = vld [vmem:[#allocation2 + $0x1b0] sm:$0xff]
    %v120 = vld [vmem:[#allocation2 + $0x1b8] sm:$0xff]
    %v121 = vld [vmem:[#allocation2 + $0x1c0] sm:$0xff]
    %v122 = vld [vmem:[#allocation2 + $0x1c8] sm:$0xff]
    %v123 = vld [vmem:[#allocation2 + $0x1d0] sm:$0xff]
    %v124 = vld [vmem:[#allocation2 + $0x1d8] sm:$0xff]
    %v125 = vld [vmem:[#allocation2 + $0x1e0] sm:$0xff]
    %v126 = vld [vmem:[#allocation2 + $0x1e8] sm:$0xff]
    %v127 = vld [vmem:[#allocation2 + $0x1f0] sm:$0xff]
    %v128 = vld [vmem:[#allocation2 + $0x1f8] sm:$0xff]
    %v129 = vld [vmem:[#allocation2 + $0x200] sm:$0xff]
    %v130 = vld [vmem:[#allocation2 + $0x208] sm:$0xff]
    %v131 = vld [vmem:[#allocation2 + $0x210] sm:$0xff]
    %v132 = vld [vmem:[#allocation2 + $0x218] sm:$0xff]
    %v133 = vld [vmem:[#allocation2 + $0x220] sm:$0xff]
    %v134 = vld [vmem:[#allocation2 + $0x228] sm:$0xff]
    %v135 = vld [vmem:[#allocation2 + $0x230] sm:$0xff]
    %v136 = vld [vmem:[#allocation2 + $0x238] sm:$0xff]
    %v137 = vld [vmem:[#allocation2 + $0x240] sm:$0xff]
    %v138 = vld [vmem:[#allocation2 + $0x248] sm:$0xff]
    %v139 = vld [vmem:[#allocation2 + $0x250] sm:$0xff]
    %v140 = vld [vmem:[#allocation2 + $0x258] sm:$0xff]
    %v141 = vld [vmem:[#allocation2 + $0x260] sm:$0xff]
    %v142 = vld [vmem:[#allocation2 + $0x268] sm:$0xff]
    %v143 = vld [vmem:[#allocation2 + $0x270] sm:$0xff]
    %v144 = vld [vmem:[#allocation2 + $0x278] sm:$0xff]
    %v145 = vld [vmem:[#allocation2 + $0x280] sm:$0xff]
    %v146 = vld [vmem:[#allocation2 + $0x288] sm:$0xff]
    %v147 = vld [vmem:[#allocation2 + $0x290] sm:$0xff]
    %v148 = vld [vmem:[#allocation2 + $0x298] sm:$0xff]
    %v149 = vld [vmem:[#allocation2 + $0x2a0] sm:$0xff]
    %v150 = vld [vmem:[#allocation2 + $0x2a8] sm:$0xff]
    %v151 = vld [vmem:[#allocation2 + $0x2b0] sm:$0xff]
    %v152 = vld [vmem:[#allocation2 + $0x2b8] sm:$0xff]
    %v153 = vld [vmem:[#allocation2 + $0x2c0] sm:$0xff]
    %v154 = vld [vmem:[#allocation2 + $0x2c8] sm:$0xff]
    %v155 = vld [vmem:[#allocation2 + $0x2d0] sm:$0xff]
    %v156 = vld [vmem:[#allocation2 + $0x2d8] sm:$0xff]
    %v157 = vld [vmem:[#allocation2 + $0x2e0] sm:$0xff]
    %v158 = vld [vmem:[#allocation2 + $0x2e8] sm:$0xff]
    %v159 = vld [vmem:[#allocation2 + $0x2f0] sm:$0xff]
    %v160 = vld [vmem:[#allocation2 + $0x2f8] sm:$0xff]
    %v161 = vld [vmem:[#allocation2 + $0x300] sm:$0xff]
    %v162 = vld [vmem:[#allocation2 + $0x308] sm:$0xff]
    %v163 = vld [vmem:[#allocation2 + $0x310] sm:$0xff]
    %v164 = vld [vmem:[#allocation2 + $0x318] sm:$0xff]
    %v165 = vld [vmem:[#allocation2 + $0x320] sm:$0xff]
    %v166 = vld [vmem:[#allocation2 + $0x328] sm:$0xff]
    %v167 = vld [vmem:[#allocation2 + $0x330] sm:$0xff]
    %v168 = vld [vmem:[#allocation2 + $0x338] sm:$0xff]
    %v169 = vld [vmem:[#allocation2 + $0x340] sm:$0xff]
    %v170 = vld [vmem:[#allocation2 + $0x348] sm:$0xff]
    %v171 = vld [vmem:[#allocation2 + $0x350] sm:$0xff]
    %v172 = vld [vmem:[#allocation2 + $0x358] sm:$0xff]
    %v173 = vld [vmem:[#allocation2 + $0x360] sm:$0xff]
    %v174 = vld [vmem:[#allocation2 + $0x368] sm:$0xff]
    %v175 = vld [vmem:[#allocation2 + $0x370] sm:$0xff]
    %v176 = vld [vmem:[#allocation2 + $0x378] sm:$0xff]
    %v177 = vld [vmem:[#allocation2 + $0x380] sm:$0xff]
    %v178 = vld [vmem:[#allocation2 + $0x388] sm:$0xff]
    %v179 = vld [vmem:[#allocation2 + $0x390] sm:$0xff]
    %v180 = vld [vmem:[#allocation2 + $0x398] sm:$0xff]
    %v181 = vld [vmem:[#allocation2 + $0x3a0] sm:$0xff]
    %v182 = vld [vmem:[#allocation2 + $0x3a8] sm:$0xff]
    %v183 = vld [vmem:[#allocation2 + $0x3b0] sm:$0xff]
    %v184 = vld [vmem:[#allocation2 + $0x3b8] sm:$0xff]
    %v185 = vld [vmem:[#allocation2 + $0x3c0] sm:$0xff]
    %v186 = vld [vmem:[#allocation2 + $0x3c8] sm:$0xff]
    %v187 = vld [vmem:[#allocation2 + $0x3d0] sm:$0xff]
    %v188 = vld [vmem:[#allocation2 + $0x3d8] sm:$0xff]
    %v189 = vld [vmem:[#allocation2 + $0x3e0] sm:$0xff]
    %v190 = vld [vmem:[#allocation2 + $0x3e8] sm:$0xff]
    %v191 = vld [vmem:[#allocation2 + $0x3f0] sm:$0xff]
    %v192 = vld [vmem:[#allocation2 + $0x3f8] sm:$0xff]
    %v193 = vld [vmem:[%s4] ss:$8 sm:$0x3]
    %v195 = vlaneseq
    %v196 = vshrl.u32 %v195, 7
    %v197 = vsub.s32 0, %v196
    %v198 = vrot.slane %v193, %v197
    %v199 = vlaneseq
    %v200 = vshrl.u32 %v199, 7
    %v201 = vsub.s32 1, %v200
    %v202 = vrot.slane %v193, %v201
    %v209 = vunpack.c.l.b16 %v61
    %v210 = vunpack.c.h.b16 %v61
    %v211 = vunpack.c.l.b16 %v62
    %v212 = vunpack.c.h.b16 %v62
    %v213 = vunpack.c.l.b16 %v63
    %v214 = vunpack.c.h.b16 %v63
    %v215 = vunpack.c.l.b16 %v64
    %v216 = vunpack.c.h.b16 %v64
    %v217 = vpack.c.b16 %v209, %v209
    %v218 = vpack.c.b16 %v210, %v210
    %v219 = vpack.c.b16 %v211, %v211
    %v220 = vpack.c.b16 %v212, %v212
    %v221 = vpack.c.b16 %v213, %v213
    %v222 = vpack.c.b16 %v214, %v214
    %v223 = vpack.c.b16 %v215, %v215
    %v224 = vpack.c.b16 %v216, %v216
    %v361 = vunpack.c.l.b16 %v65
    %v362 = vunpack.c.h.b16 %v65
    %v363 = vunpack.c.l.b16 %v66
    %v364 = vunpack.c.h.b16 %v66
    %v365 = vunpack.c.l.b16 %v67
    %v366 = vunpack.c.h.b16 %v67
    %v367 = vunpack.c.l.b16 %v68
    %v368 = vunpack.c.h.b16 %v68
    %v369 = vunpack.c.l.b16 %v69
    %v370 = vunpack.c.h.b16 %v69
    %v371 = vunpack.c.l.b16 %v70
    %v372 = vunpack.c.h.b16 %v70
    %v373 = vunpack.c.l.b16 %v71
    %v374 = vunpack.c.h.b16 %v71
    %v375 = vunpack.c.l.b16 %v72
    %v376 = vunpack.c.h.b16 %v72
    %v377 = vunpack.c.l.b16 %v73
    %v378 = vunpack.c.h.b16 %v73
    %v379 = vunpack.c.l.b16 %v74
    %v380 = vunpack.c.h.b16 %v74
    %v381 = vunpack.c.l.b16 %v75
    %v382 = vunpack.c.h.b16 %v75
    %v383 = vunpack.c.l.b16 %v76
    %v384 = vunpack.c.h.b16 %v76
    %v385 = vunpack.c.l.b16 %v77
    %v386 = vunpack.c.h.b16 %v77
    %v387 = vunpack.c.l.b16 %v78
    %v388 = vunpack.c.h.b16 %v78
    %v389 = vunpack.c.l.b16 %v79
    %v390 = vunpack.c.h.b16 %v79
    %v391 = vunpack.c.l.b16 %v80
    %v392 = vunpack.c.h.b16 %v80
    %v393 = vunpack.c.l.b16 %v81
    %v394 = vunpack.c.h.b16 %v81
    %v395 = vunpack.c.l.b16 %v82
    %v396 = vunpack.c.h.b16 %v82
    %v397 = vunpack.c.l.b16 %v83
    %v398 = vunpack.c.h.b16 %v83
    %v399 = vunpack.c.l.b16 %v84
    %v400 = vunpack.c.h.b16 %v84
    %v401 = vunpack.c.l.b16 %v85
    %v402 = vunpack.c.h.b16 %v85
    %v403 = vunpack.c.l.b16 %v86
    %v404 = vunpack.c.h.b16 %v86
    %v405 = vunpack.c.l.b16 %v87
    %v406 = vunpack.c.h.b16 %v87
    %v407 = vunpack.c.l.b16 %v88
    %v408 = vunpack.c.h.b16 %v88
    %v409 = vunpack.c.l.b16 %v89
    %v410 = vunpack.c.h.b16 %v89
    %v411 = vunpack.c.l.b16 %v90
    %v412 = vunpack.c.h.b16 %v90
    %v413 = vunpack.c.l.b16 %v91
    %v414 = vunpack.c.h.b16 %v91
    %v415 = vunpack.c.l.b16 %v92
    %v416 = vunpack.c.h.b16 %v92
    %v417 = vunpack.c.l.b16 %v93
    %v418 = vunpack.c.h.b16 %v93
    %v419 = vunpack.c.l.b16 %v94
    %v420 = vunpack.c.h.b16 %v94
    %v421 = vunpack.c.l.b16 %v95
    %v422 = vunpack.c.h.b16 %v95
    %v423 = vunpack.c.l.b16 %v96
    %v424 = vunpack.c.h.b16 %v96
    %v425 = vunpack.c.l.b16 %v97
    %v426 = vunpack.c.h.b16 %v97
    %v427 = vunpack.c.l.b16 %v98
    %v428 = vunpack.c.h.b16 %v98
    %v429 = vunpack.c.l.b16 %v99
    %v430 = vunpack.c.h.b16 %v99
    %v431 = vunpack.c.l.b16 %v100
    %v432 = vunpack.c.h.b16 %v100
    %v433 = vunpack.c.l.b16 %v101
    %v434 = vunpack.c.h.b16 %v101
    %v435 = vunpack.c.l.b16 %v102
    %v436 = vunpack.c.h.b16 %v102
    %v437 = vunpack.c.l.b16 %v103
    %v438 = vunpack.c.h.b16 %v103
    %v439 = vunpack.c.l.b16 %v104
    %v440 = vunpack.c.h.b16 %v104
    %v441 = vunpack.c.l.b16 %v105
    %v442 = vunpack.c.h.b16 %v105
    %v443 = vunpack.c.l.b16 %v106
    %v444 = vunpack.c.h.b16 %v106
    %v445 = vunpack.c.l.b16 %v107
    %v446 = vunpack.c.h.b16 %v107
    %v447 = vunpack.c.l.b16 %v108
    %v448 = vunpack.c.h.b16 %v108
    %v449 = vunpack.c.l.b16 %v109
    %v450 = vunpack.c.h.b16 %v109
    %v451 = vunpack.c.l.b16 %v110
    %v452 = vunpack.c.h.b16 %v110
    %v453 = vunpack.c.l.b16 %v111
    %v454 = vunpack.c.h.b16 %v111
    %v455 = vunpack.c.l.b16 %v112
    %v456 = vunpack.c.h.b16 %v112
    %v457 = vunpack.c.l.b16 %v113
    %v458 = vunpack.c.h.b16 %v113
    %v459 = vunpack.c.l.b16 %v114
    %v460 = vunpack.c.h.b16 %v114
    %v461 = vunpack.c.l.b16 %v115
    %v462 = vunpack.c.h.b16 %v115
    %v463 = vunpack.c.l.b16 %v116
    %v464 = vunpack.c.h.b16 %v116
    %v465 = vunpack.c.l.b16 %v117
    %v466 = vunpack.c.h.b16 %v117
    %v467 = vunpack.c.l.b16 %v118
    %v468 = vunpack.c.h.b16 %v118
    %v469 = vunpack.c.l.b16 %v119
    %v470 = vunpack.c.h.b16 %v119
    %v471 = vunpack.c.l.b16 %v120
    %v472 = vunpack.c.h.b16 %v120
    %v473 = vunpack.c.l.b16 %v121
    %v474 = vunpack.c.h.b16 %v121
    %v475 = vunpack.c.l.b16 %v122
    %v476 = vunpack.c.h.b16 %v122
    %v477 = vunpack.c.l.b16 %v123
    %v478 = vunpack.c.h.b16 %v123
    %v479 = vunpack.c.l.b16 %v124
    %v480 = vunpack.c.h.b16 %v124
    %v481 = vunpack.c.l.b16 %v125
    %v482 = vunpack.c.h.b16 %v125
    %v483 = vunpack.c.l.b16 %v126
    %v484 = vunpack.c.h.b16 %v126
    %v485 = vunpack.c.l.b16 %v127
    %v486 = vunpack.c.h.b16 %v127
    %v487 = vunpack.c.l.b16 %v128
    %v488 = vunpack.c.h.b16 %v128
    %v489 = vunpack.c.l.b16 %v129
    %v490 = vunpack.c.h.b16 %v129
    %v491 = vunpack.c.l.b16 %v130
    %v492 = vunpack.c.h.b16 %v130
    %v493 = vunpack.c.l.b16 %v131
    %v494 = vunpack.c.h.b16 %v131
    %v495 = vunpack.c.l.b16 %v132
    %v496 = vunpack.c.h.b16 %v132
    %v497 = vunpack.c.l.b16 %v133
    %v498 = vunpack.c.h.b16 %v133
    %v499 = vunpack.c.l.b16 %v134
    %v500 = vunpack.c.h.b16 %v134
    %v501 = vunpack.c.l.b16 %v135
    %v502 = vunpack.c.h.b16 %v135
    %v503 = vunpack.c.l.b16 %v136
    %v504 = vunpack.c.h.b16 %v136
    %v505 = vunpack.c.l.b16 %v137
    %v506 = vunpack.c.h.b16 %v137
    %v507 = vunpack.c.l.b16 %v138
    %v508 = vunpack.c.h.b16 %v138
    %v509 = vunpack.c.l.b16 %v139
    %v510 = vunpack.c.h.b16 %v139
    %v511 = vunpack.c.l.b16 %v140
    %v512 = vunpack.c.h.b16 %v140
    %v513 = vunpack.c.l.b16 %v141
    %v514 = vunpack.c.h.b16 %v141
    %v515 = vunpack.c.l.b16 %v142
    %v516 = vunpack.c.h.b16 %v142
    %v517 = vunpack.c.l.b16 %v143
    %v518 = vunpack.c.h.b16 %v143
    %v519 = vunpack.c.l.b16 %v144
    %v520 = vunpack.c.h.b16 %v144
    %v521 = vunpack.c.l.b16 %v145
    %v522 = vunpack.c.h.b16 %v145
    %v523 = vunpack.c.l.b16 %v146
    %v524 = vunpack.c.h.b16 %v146
    %v525 = vunpack.c.l.b16 %v147
    %v526 = vunpack.c.h.b16 %v147
    %v527 = vunpack.c.l.b16 %v148
    %v528 = vunpack.c.h.b16 %v148
    %v529 = vunpack.c.l.b16 %v149
    %v530 = vunpack.c.h.b16 %v149
    %v531 = vunpack.c.l.b16 %v150
    %v532 = vunpack.c.h.b16 %v150
    %v533 = vunpack.c.l.b16 %v151
    %v534 = vunpack.c.h.b16 %v151
    %v535 = vunpack.c.l.b16 %v152
    %v536 = vunpack.c.h.b16 %v152
    %v537 = vunpack.c.l.b16 %v153
    %v538 = vunpack.c.h.b16 %v153
    %v539 = vunpack.c.l.b16 %v154
    %v540 = vunpack.c.h.b16 %v154
    %v541 = vunpack.c.l.b16 %v155
    %v542 = vunpack.c.h.b16 %v155
    %v543 = vunpack.c.l.b16 %v156
    %v544 = vunpack.c.h.b16 %v156
    %v545 = vunpack.c.l.b16 %v157
    %v546 = vunpack.c.h.b16 %v157
    %v547 = vunpack.c.l.b16 %v158
    %v548 = vunpack.c.h.b16 %v158
    %v549 = vunpack.c.l.b16 %v159
    %v550 = vunpack.c.h.b16 %v159
    %v551 = vunpack.c.l.b16 %v160
    %v552 = vunpack.c.h.b16 %v160
    %v553 = vunpack.c.l.b16 %v161
    %v554 = vunpack.c.h.b16 %v161
    %v555 = vunpack.c.l.b16 %v162
    %v556 = vunpack.c.h.b16 %v162
    %v557 = vunpack.c.l.b16 %v163
    %v558 = vunpack.c.h.b16 %v163
    %v559 = vunpack.c.l.b16 %v164
    %v560 = vunpack.c.h.b16 %v164
    %v561 = vunpack.c.l.b16 %v165
    %v562 = vunpack.c.h.b16 %v165
    %v563 = vunpack.c.l.b16 %v166
    %v564 = vunpack.c.h.b16 %v166
    %v565 = vunpack.c.l.b16 %v167
    %v566 = vunpack.c.h.b16 %v167
    %v567 = vunpack.c.l.b16 %v168
    %v568 = vunpack.c.h.b16 %v168
    %v569 = vunpack.c.l.b16 %v169
    %v570 = vunpack.c.h.b16 %v169
    %v571 = vunpack.c.l.b16 %v170
    %v572 = vunpack.c.h.b16 %v170
    %v573 = vunpack.c.l.b16 %v171
    %v574 = vunpack.c.h.b16 %v171
    %v575 = vunpack.c.l.b16 %v172
    %v576 = vunpack.c.h.b16 %v172
    %v577 = vunpack.c.l.b16 %v173
    %v578 = vunpack.c.h.b16 %v173
    %v579 = vunpack.c.l.b16 %v174
    %v580 = vunpack.c.h.b16 %v174
    %v581 = vunpack.c.l.b16 %v175
    %v582 = vunpack.c.h.b16 %v175
    %v583 = vunpack.c.l.b16 %v176
    %v584 = vunpack.c.h.b16 %v176
    %v585 = vunpack.c.l.b16 %v177
    %v586 = vunpack.c.h.b16 %v177
    %v587 = vunpack.c.l.b16 %v178
    %v588 = vunpack.c.h.b16 %v178
    %v589 = vunpack.c.l.b16 %v179
    %v590 = vunpack.c.h.b16 %v179
    %v591 = vunpack.c.l.b16 %v180
    %v592 = vunpack.c.h.b16 %v180
    %v593 = vunpack.c.l.b16 %v181
    %v594 = vunpack.c.h.b16 %v181
    %v595 = vunpack.c.l.b16 %v182
    %v596 = vunpack.c.h.b16 %v182
    %v597 = vunpack.c.l.b16 %v183
    %v598 = vunpack.c.h.b16 %v183
    %v599 = vunpack.c.l.b16 %v184
    %v600 = vunpack.c.h.b16 %v184
    %v601 = vunpack.c.l.b16 %v185
    %v602 = vunpack.c.h.b16 %v185
    %v603 = vunpack.c.l.b16 %v186
    %v604 = vunpack.c.h.b16 %v186
    %v605 = vunpack.c.l.b16 %v187
    %v606 = vunpack.c.h.b16 %v187
    %v607 = vunpack.c.l.b16 %v188
    %v608 = vunpack.c.h.b16 %v188
    %v609 = vunpack.c.l.b16 %v189
    %v610 = vunpack.c.h.b16 %v189
    %v611 = vunpack.c.l.b16 %v190
    %v612 = vunpack.c.h.b16 %v190
    %v613 = vunpack.c.l.b16 %v191
    %v614 = vunpack.c.h.b16 %v191
    %v615 = vunpack.c.l.b16 %v192
    %v616 = vunpack.c.h.b16 %v192
    %v617 = vpack.c.b16 %v363, %v361
    %v618 = vpack.c.b16 %v364, %v362
    %v619 = vpack.c.b16 %v367, %v365
    %v620 = vpack.c.b16 %v368, %v366
    %v621 = vpack.c.b16 %v371, %v369
    %v622 = vpack.c.b16 %v372, %v370
    %v623 = vpack.c.b16 %v375, %v373
    %v624 = vpack.c.b16 %v376, %v374
    %v625 = vpack.c.b16 %v379, %v377
    %v626 = vpack.c.b16 %v380, %v378
    %v627 = vpack.c.b16 %v383, %v381
    %v628 = vpack.c.b16 %v384, %v382
    %v629 = vpack.c.b16 %v387, %v385
    %v630 = vpack.c.b16 %v388, %v386
    %v631 = vpack.c.b16 %v391, %v389
    %v632 = vpack.c.b16 %v392, %v390
    %v633 = vpack.c.b16 %v395, %v393
    %v634 = vpack.c.b16 %v396, %v394
    %v635 = vpack.c.b16 %v399, %v397
    %v636 = vpack.c.b16 %v400, %v398
    %v637 = vpack.c.b16 %v403, %v401
    %v638 = vpack.c.b16 %v404, %v402
    %v639 = vpack.c.b16 %v407, %v405
    %v640 = vpack.c.b16 %v408, %v406
    %v641 = vpack.c.b16 %v411, %v409
    %v642 = vpack.c.b16 %v412, %v410
    %v643 = vpack.c.b16 %v415, %v413
    %v644 = vpack.c.b16 %v416, %v414
    %v645 = vpack.c.b16 %v419, %v417
    %v646 = vpack.c.b16 %v420, %v418
    %v647 = vpack.c.b16 %v423, %v421
    %v648 = vpack.c.b16 %v424, %v422
    %v649 = vpack.c.b16 %v427, %v425
    %v650 = vpack.c.b16 %v428, %v426
    %v651 = vpack.c.b16 %v431, %v429
    %v652 = vpack.c.b16 %v432, %v430
    %v653 = vpack.c.b16 %v435, %v433
    %v654 = vpack.c.b16 %v436, %v434
    %v655 = vpack.c.b16 %v439, %v437
    %v656 = vpack.c.b16 %v440, %v438
    %v657 = vpack.c.b16 %v443, %v441
    %v658 = vpack.c.b16 %v444, %v442
    %v659 = vpack.c.b16 %v447, %v445
    %v660 = vpack.c.b16 %v448, %v446
    %v661 = vpack.c.b16 %v451, %v449
    %v662 = vpack.c.b16 %v452, %v450
    %v663 = vpack.c.b16 %v455, %v453
    %v664 = vpack.c.b16 %v456, %v454
    %v665 = vpack.c.b16 %v459, %v457
    %v666 = vpack.c.b16 %v460, %v458
    %v667 = vpack.c.b16 %v463, %v461
    %v668 = vpack.c.b16 %v464, %v462
    %v669 = vpack.c.b16 %v467, %v465
    %v670 = vpack.c.b16 %v468, %v466
    %v671 = vpack.c.b16 %v471, %v469
    %v672 = vpack.c.b16 %v472, %v470
    %v673 = vpack.c.b16 %v475, %v473
    %v674 = vpack.c.b16 %v476, %v474
    %v675 = vpack.c.b16 %v479, %v477
    %v676 = vpack.c.b16 %v480, %v478
    %v677 = vpack.c.b16 %v483, %v481
    %v678 = vpack.c.b16 %v484, %v482
    %v679 = vpack.c.b16 %v487, %v485
    %v680 = vpack.c.b16 %v488, %v486
    %v681 = vpack.c.b16 %v491, %v489
    %v682 = vpack.c.b16 %v492, %v490
    %v683 = vpack.c.b16 %v495, %v493
    %v684 = vpack.c.b16 %v496, %v494
    %v685 = vpack.c.b16 %v499, %v497
    %v686 = vpack.c.b16 %v500, %v498
    %v687 = vpack.c.b16 %v503, %v501
    %v688 = vpack.c.b16 %v504, %v502
    %v689 = vpack.c.b16 %v507, %v505
    %v690 = vpack.c.b16 %v508, %v506
    %v691 = vpack.c.b16 %v511, %v509
    %v692 = vpack.c.b16 %v512, %v510
    %v693 = vpack.c.b16 %v515, %v513
    %v694 = vpack.c.b16 %v516, %v514
    %v695 = vpack.c.b16 %v519, %v517
    %v696 = vpack.c.b16 %v520, %v518
    %v697 = vpack.c.b16 %v523, %v521
    %v698 = vpack.c.b16 %v524, %v522
    %v699 = vpack.c.b16 %v527, %v525
    %v700 = vpack.c.b16 %v528, %v526
    %v701 = vpack.c.b16 %v531, %v529
    %v702 = vpack.c.b16 %v532, %v530
    %v703 = vpack.c.b16 %v535, %v533
    %v704 = vpack.c.b16 %v536, %v534
    %v705 = vpack.c.b16 %v539, %v537
    %v706 = vpack.c.b16 %v540, %v538
    %v707 = vpack.c.b16 %v543, %v541
    %v708 = vpack.c.b16 %v544, %v542
    %v709 = vpack.c.b16 %v547, %v545
    %v710 = vpack.c.b16 %v548, %v546
    %v711 = vpack.c.b16 %v551, %v549
    %v712 = vpack.c.b16 %v552, %v550
    %v713 = vpack.c.b16 %v555, %v553
    %v714 = vpack.c.b16 %v556, %v554
    %v715 = vpack.c.b16 %v559, %v557
    %v716 = vpack.c.b16 %v560, %v558
    %v717 = vpack.c.b16 %v563, %v561
    %v718 = vpack.c.b16 %v564, %v562
    %v719 = vpack.c.b16 %v567, %v565
    %v720 = vpack.c.b16 %v568, %v566
    %v721 = vpack.c.b16 %v571, %v569
    %v722 = vpack.c.b16 %v572, %v570
    %v723 = vpack.c.b16 %v575, %v573
    %v724 = vpack.c.b16 %v576, %v574
    %v725 = vpack.c.b16 %v579, %v577
    %v726 = vpack.c.b16 %v580, %v578
    %v727 = vpack.c.b16 %v583, %v581
    %v728 = vpack.c.b16 %v584, %v582
    %v729 = vpack.c.b16 %v587, %v585
    %v730 = vpack.c.b16 %v588, %v586
    %v731 = vpack.c.b16 %v591, %v589
    %v732 = vpack.c.b16 %v592, %v590
    %v733 = vpack.c.b16 %v595, %v593
    %v734 = vpack.c.b16 %v596, %v594
    %v735 = vpack.c.b16 %v599, %v597
    %v736 = vpack.c.b16 %v600, %v598
    %v737 = vpack.c.b16 %v603, %v601
    %v738 = vpack.c.b16 %v604, %v602
    %v739 = vpack.c.b16 %v607, %v605
    %v740 = vpack.c.b16 %v608, %v606
    %v741 = vpack.c.b16 %v611, %v609
    %v742 = vpack.c.b16 %v612, %v610
    %v743 = vpack.c.b16 %v615, %v613
    %v744 = vpack.c.b16 %v616, %v614
    %873 = vmatprep.subr.bf16.mxu0 %v618
    %874 = vmatpush1.bf16.msra.mxu0 %v617
    %875 = vmatprep.subr.bf16.mxu0 %v620
    %876 = vmatpush1.bf16.msra.mxu0 %v619
    %877 = vmatprep.subr.bf16.mxu0 %v622
    %878 = vmatpush1.bf16.msra.mxu0 %v621
    %879 = vmatprep.subr.bf16.mxu0 %v624
    %880 = vmatpush1.bf16.msra.mxu0 %v623
    %881 = vmatprep.subr.bf16.mxu0 %v626
    %882 = vmatpush1.bf16.msra.mxu0 %v625
    %883 = vmatprep.subr.bf16.mxu0 %v628
    %884 = vmatpush1.bf16.msra.mxu0 %v627
    %885 = vmatprep.subr.bf16.mxu0 %v630
    %886 = vmatpush1.bf16.msra.mxu0 %v629
    %887 = vmatprep.subr.bf16.mxu0 %v632
    %888 = vmatpush1.bf16.msra.mxu0 %v631
    %889 = vmatprep.subr.bf16.mxu0 %v634
    %890 = vmatpush1.bf16.msra.mxu0 %v633
    %891 = vmatprep.subr.bf16.mxu0 %v636
    %892 = vmatpush1.bf16.msra.mxu0 %v635
    %893 = vmatprep.subr.bf16.mxu0 %v638
    %894 = vmatpush1.bf16.msra.mxu0 %v637
    %895 = vmatprep.subr.bf16.mxu0 %v640
    %896 = vmatpush1.bf16.msra.mxu0 %v639
    %897 = vmatprep.subr.bf16.mxu0 %v642
    %898 = vmatpush1.bf16.msra.mxu0 %v641
    %899 = vmatprep.subr.bf16.mxu0 %v644
    %900 = vmatpush1.bf16.msra.mxu0 %v643
    %901 = vmatprep.subr.bf16.mxu0 %v646
    %902 = vmatpush1.bf16.msra.mxu0 %v645
    %903 = vmatprep.subr.bf16.mxu0 %v648
    %904 = vmatpush1.bf16.msra.mxu0 %v647
    %905 = vmatprep.mubr.bf16.mxu0 %v218
    %906 = vmatmul.mubr.bf16.gmra.mrb[0].mxu0 %v217
    %v907 = vpop.f32.mrb[0].mxu0
    %v908 = vadd.f32 %v198, %v907
    %v909 = vpop.f32.mrb[0].mxu0
    %v910 = vadd.f32 %v202, %v909
    %v911 = vpop.f32.mrb[0].mxu0
    %v912 = vpop.f32.mrb[0].mxu0
    %913 = vdwg.mxu0
    %914 = vmatprep.subr.bf16.mxu0 %v650
    %915 = vmatpush1.bf16.msra.mxu0 %v649
    %916 = vmatprep.subr.bf16.mxu0 %v652
    %917 = vmatpush1.bf16.msra.mxu0 %v651
    %918 = vmatprep.subr.bf16.mxu0 %v654
    %919 = vmatpush1.bf16.msra.mxu0 %v653
    %920 = vmatprep.subr.bf16.mxu0 %v656
    %921 = vmatpush1.bf16.msra.mxu0 %v655
    %922 = vmatprep.subr.bf16.mxu0 %v658
    %923 = vmatpush1.bf16.msra.mxu0 %v657
    %924 = vmatprep.subr.bf16.mxu0 %v660
    %925 = vmatpush1.bf16.msra.mxu0 %v659
    %926 = vmatprep.subr.bf16.mxu0 %v662
    %927 = vmatpush1.bf16.msra.mxu0 %v661
    %928 = vmatprep.subr.bf16.mxu0 %v664
    %929 = vmatpush1.bf16.msra.mxu0 %v663
    %930 = vmatprep.subr.bf16.mxu0 %v666
    %931 = vmatpush1.bf16.msra.mxu0 %v665
    %932 = vmatprep.subr.bf16.mxu0 %v668
    %933 = vmatpush1.bf16.msra.mxu0 %v667
    %934 = vmatprep.subr.bf16.mxu0 %v670
    %935 = vmatpush1.bf16.msra.mxu0 %v669
    %936 = vmatprep.subr.bf16.mxu0 %v672
    %937 = vmatpush1.bf16.msra.mxu0 %v671
    %938 = vmatprep.subr.bf16.mxu0 %v674
    %939 = vmatpush1.bf16.msra.mxu0 %v673
    %940 = vmatprep.subr.bf16.mxu0 %v676
    %941 = vmatpush1.bf16.msra.mxu0 %v675
    %942 = vmatprep.subr.bf16.mxu0 %v678
    %943 = vmatpush1.bf16.msra.mxu0 %v677
    %944 = vmatprep.subr.bf16.mxu0 %v680
    %945 = vmatpush1.bf16.msra.mxu0 %v679
    %946 = vmatprep.mubr.bf16.mxu0 %v220
    %947 = vmatmul.mubr.bf16.gmra.mrb[0].mxu0 %v219
    %v948 = vpop.f32.mrb[0].mxu0
    %v949 = vadd.f32 %v908, %v948
    %v950 = vpop.f32.mrb[0].mxu0
    %v951 = vadd.f32 %v910, %v950
    %v952 = vpop.f32.mrb[0].mxu0
    %v953 = vpop.f32.mrb[0].mxu0
    %954 = vdwg.mxu0
    %955 = vmatprep.subr.bf16.mxu0 %v682
    %956 = vmatpush1.bf16.msra.mxu0 %v681
    %957 = vmatprep.subr.bf16.mxu0 %v684
    %958 = vmatpush1.bf16.msra.mxu0 %v683
    %959 = vmatprep.subr.bf16.mxu0 %v686
    %960 = vmatpush1.bf16.msra.mxu0 %v685
    %961 = vmatprep.subr.bf16.mxu0 %v688
    %962 = vmatpush1.bf16.msra.mxu0 %v687
    %963 = vmatprep.subr.bf16.mxu0 %v690
    %964 = vmatpush1.bf16.msra.mxu0 %v689
    %965 = vmatprep.subr.bf16.mxu0 %v692
    %966 = vmatpush1.bf16.msra.mxu0 %v691
    %967 = vmatprep.subr.bf16.mxu0 %v694
    %968 = vmatpush1.bf16.msra.mxu0 %v693
    %969 = vmatprep.subr.bf16.mxu0 %v696
    %970 = vmatpush1.bf16.msra.mxu0 %v695
    %971 = vmatprep.subr.bf16.mxu0 %v698
    %972 = vmatpush1.bf16.msra.mxu0 %v697
    %973 = vmatprep.subr.bf16.mxu0 %v700
    %974 = vmatpush1.bf16.msra.mxu0 %v699
    %975 = vmatprep.subr.bf16.mxu0 %v702
    %976 = vmatpush1.bf16.msra.mxu0 %v701
    %977 = vmatprep.subr.bf16.mxu0 %v704
    %978 = vmatpush1.bf16.msra.mxu0 %v703
    %979 = vmatprep.subr.bf16.mxu0 %v706
    %980 = vmatpush1.bf16.msra.mxu0 %v705
    %981 = vmatprep.subr.bf16.mxu0 %v708
    %982 = vmatpush1.bf16.msra.mxu0 %v707
    %983 = vmatprep.subr.bf16.mxu0 %v710
    %984 = vmatpush1.bf16.msra.mxu0 %v709
    %985 = vmatprep.subr.bf16.mxu0 %v712
    %986 = vmatpush1.bf16.msra.mxu0 %v711
    %987 = vmatprep.mubr.bf16.mxu0 %v222
    %988 = vmatmul.mubr.bf16.gmra.mrb[0].mxu0 %v221
    %v989 = vpop.f32.mrb[0].mxu0
    %v990 = vadd.f32 %v949, %v989
    %v991 = vpop.f32.mrb[0].mxu0
    %v992 = vadd.f32 %v951, %v991
    %v993 = vpop.f32.mrb[0].mxu0
    %v994 = vpop.f32.mrb[0].mxu0
    %995 = vdwg.mxu0
    %996 = vmatprep.subr.bf16.mxu0 %v714
    %997 = vmatpush1.bf16.msra.mxu0 %v713
    %998 = vmatprep.subr.bf16.mxu0 %v716
    %999 = vmatpush1.bf16.msra.mxu0 %v715
    %1000 = vmatprep.subr.bf16.mxu0 %v718
    %1001 = vmatpush1.bf16.msra.mxu0 %v717
    %1002 = vmatprep.subr.bf16.mxu0 %v720
    %1003 = vmatpush1.bf16.msra.mxu0 %v719
    %1004 = vmatprep.subr.bf16.mxu0 %v722
    %1005 = vmatpush1.bf16.msra.mxu0 %v721
    %1006 = vmatprep.subr.bf16.mxu0 %v724
    %1007 = vmatpush1.bf16.msra.mxu0 %v723
    %1008 = vmatprep.subr.bf16.mxu0 %v726
    %1009 = vmatpush1.bf16.msra.mxu0 %v725
    %1010 = vmatprep.subr.bf16.mxu0 %v728
    %1011 = vmatpush1.bf16.msra.mxu0 %v727
    %1012 = vmatprep.subr.bf16.mxu0 %v730
    %1013 = vmatpush1.bf16.msra.mxu0 %v729
    %1014 = vmatprep.subr.bf16.mxu0 %v732
    %1015 = vmatpush1.bf16.msra.mxu0 %v731
    %1016 = vmatprep.subr.bf16.mxu0 %v734
    %1017 = vmatpush1.bf16.msra.mxu0 %v733
    %1018 = vmatprep.subr.bf16.mxu0 %v736
    %1019 = vmatpush1.bf16.msra.mxu0 %v735
    %1020 = vmatprep.subr.bf16.mxu0 %v738
    %1021 = vmatpush1.bf16.msra.mxu0 %v737
    %1022 = vmatprep.subr.bf16.mxu0 %v740
    %1023 = vmatpush1.bf16.msra.mxu0 %v739
    %1024 = vmatprep.subr.bf16.mxu0 %v742
    %1025 = vmatpush1.bf16.msra.mxu0 %v741
    %1026 = vmatprep.subr.bf16.mxu0 %v744
    %1027 = vmatpush1.bf16.msra.mxu0 %v743
    %1028 = vmatprep.mubr.bf16.mxu0 %v224
    %1029 = vmatmul.mubr.bf16.gmra.mrb[0].mxu0 %v223
    %v1030 = vpop.f32.mrb[0].mxu0
    %v1031 = vadd.f32 %v990, %v1030
    %v1032 = vpop.f32.mrb[0].mxu0
    %v1033 = vadd.f32 %v992, %v1032
    %v1034 = vpop.f32.mrb[0].mxu0
    %v1035 = vpop.f32.mrb[0].mxu0
    %1036 = vdwg.mxu0
    %v1037 = vmax.f32 %v1031, 0.0
    %v1038 = vmax.f32 %v1033, 0.0
    %v1039 = vld [vmem:[#allocation4] sm:$0xff]
    %v1040 = vld [vmem:[#allocation4 + $0x8] sm:$0xff]
    %v1041 = vld [vmem:[#allocation4 + $0x10] sm:$0xff]
    %v1042 = vld [vmem:[#allocation4 + $0x18] sm:$0xff]
    %v1043 = vld [vmem:[#allocation4 + $0x20] sm:$0xff]
    %v1044 = vld [vmem:[#allocation4 + $0x28] sm:$0xff]
    %v1045 = vld [vmem:[#allocation4 + $0x30] sm:$0xff]
    %v1046 = vld [vmem:[#allocation4 + $0x38] sm:$0xff]
    %v1047 = vld [vmem:[#allocation4 + $0x40] sm:$0xff]
    %v1048 = vld [vmem:[#allocation4 + $0x48] sm:$0xff]
    %v1049 = vld [vmem:[#allocation4 + $0x50] sm:$0xff]
    %v1050 = vld [vmem:[#allocation4 + $0x58] sm:$0xff]
    %v1051 = vld [vmem:[#allocation4 + $0x60] sm:$0xff]
    %v1052 = vld [vmem:[#allocation4 + $0x68] sm:$0xff]
    %v1053 = vld [vmem:[#allocation4 + $0x70] sm:$0xff]
    %v1054 = vld [vmem:[#allocation4 + $0x78] sm:$0xff]
    %v1055 = vld [vmem:[#allocation4 + $0x80] sm:$0xff]
    %v1056 = vld [vmem:[#allocation4 + $0x88] sm:$0xff]
    %v1057 = vld [vmem:[#allocation4 + $0x90] sm:$0xff]
    %v1058 = vld [vmem:[#allocation4 + $0x98] sm:$0xff]
    %v1059 = vld [vmem:[#allocation4 + $0xa0] sm:$0xff]
    %v1060 = vld [vmem:[#allocation4 + $0xa8] sm:$0xff]
    %v1061 = vld [vmem:[#allocation4 + $0xb0] sm:$0xff]
    %v1062 = vld [vmem:[#allocation4 + $0xb8] sm:$0xff]
    %v1063 = vld [vmem:[#allocation4 + $0xc0] sm:$0xff]
    %v1064 = vld [vmem:[#allocation4 + $0xc8] sm:$0xff]
    %v1065 = vld [vmem:[#allocation4 + $0xd0] sm:$0xff]
    %v1066 = vld [vmem:[#allocation4 + $0xd8] sm:$0xff]
    %v1067 = vld [vmem:[#allocation4 + $0xe0] sm:$0xff]
    %v1068 = vld [vmem:[#allocation4 + $0xe8] sm:$0xff]
    %v1069 = vld [vmem:[#allocation4 + $0xf0] sm:$0xff]
    %v1070 = vld [vmem:[#allocation4 + $0xf8] sm:$0xff]
    %v1071 = vld [vmem:[%s4 + $0x1] ss:$0 sm:$0xff]
    %1072 = vmatprep.subr.mxu0 0.0
    %1073 = vmatpush1.msra.mxu0 %v1039
    %1074 = vmatprep.subr.mxu0 0.0
    %1075 = vmatpush1.msra.mxu0 %v1040
    %1076 = vmatprep.subr.mxu0 0.0
    %1077 = vmatpush1.msra.mxu0 %v1041
    %1078 = vmatprep.subr.mxu0 0.0
    %1079 = vmatpush1.msra.mxu0 %v1042
    %1080 = vmatprep.subr.mxu0 0.0
    %1081 = vmatpush1.msra.mxu0 %v1043
    %1082 = vmatprep.subr.mxu0 0.0
    %1083 = vmatpush1.msra.mxu0 %v1044
    %1084 = vmatprep.subr.mxu0 0.0
    %1085 = vmatpush1.msra.mxu0 %v1045
    %1086 = vmatprep.subr.mxu0 0.0
    %1087 = vmatpush1.msra.mxu0 %v1046
    %1088 = vmatprep.subr.mxu0 0.0
    %1089 = vmatpush1.msra.mxu0 %v1047
    %1090 = vmatprep.subr.mxu0 0.0
    %1091 = vmatpush1.msra.mxu0 %v1048
    %1092 = vmatprep.subr.mxu0 0.0
    %1093 = vmatpush1.msra.mxu0 %v1049
    %1094 = vmatprep.subr.mxu0 0.0
    %1095 = vmatpush1.msra.mxu0 %v1050
    %1096 = vmatprep.subr.mxu0 0.0
    %1097 = vmatpush1.msra.mxu0 %v1051
    %1098 = vmatprep.subr.mxu0 0.0
    %1099 = vmatpush1.msra.mxu0 %v1052
    %1100 = vmatprep.subr.mxu0 0.0
    %1101 = vmatpush1.msra.mxu0 %v1053
    %1102 = vmatprep.subr.mxu0 0.0
    %1103 = vmatpush1.msra.mxu0 %v1054
    %1104 = vmatprep.subr.mxu0 0.0
    %1105 = vmatpush1.msra.mxu0 %v1055
    %1106 = vmatprep.subr.mxu0 0.0
    %1107 = vmatpush1.msra.mxu0 %v1056
    %1108 = vmatprep.subr.mxu0 0.0
    %1109 = vmatpush1.msra.mxu0 %v1057
    %1110 = vmatprep.subr.mxu0 0.0
    %1111 = vmatpush1.msra.mxu0 %v1058
    %1112 = vmatprep.subr.mxu0 0.0
    %1113 = vmatpush1.msra.mxu0 %v1059
    %1114 = vmatprep.subr.mxu0 0.0
    %1115 = vmatpush1.msra.mxu0 %v1060
    %1116 = vmatprep.subr.mxu0 0.0
    %1117 = vmatpush1.msra.mxu0 %v1061
    %1118 = vmatprep.subr.mxu0 0.0
    %1119 = vmatpush1.msra.mxu0 %v1062
    %1120 = vmatprep.subr.mxu0 0.0
    %1121 = vmatpush1.msra.mxu0 %v1063
    %1122 = vmatprep.subr.mxu0 0.0
    %1123 = vmatpush1.msra.mxu0 %v1064
    %1124 = vmatprep.subr.mxu0 0.0
    %1125 = vmatpush1.msra.mxu0 %v1065
    %1126 = vmatprep.subr.mxu0 0.0
    %1127 = vmatpush1.msra.mxu0 %v1066
    %1128 = vmatprep.subr.mxu0 0.0
    %1129 = vmatpush1.msra.mxu0 %v1067
    %1130 = vmatprep.subr.mxu0 0.0
    %1131 = vmatpush1.msra.mxu0 %v1068
    %1132 = vmatprep.subr.mxu0 0.0
    %1133 = vmatpush1.msra.mxu0 %v1069
    %1134 = vmatprep.subr.mxu0 0.0
    %1135 = vmatpush1.msra.mxu0 %v1070
    %1136 = vmatprep.mubr.f32.mxu0 %v1038
    %1137 = vmatmul.mubr.f32.gmra.mrb[0].mxu0 %v1037
    %v1138 = vpop.f32.mrb[0].mxu0
    %v1139 = vadd.f32 %v1071, %v1138
    %v1140 = vpop.f32.mrb[0].mxu0
    %1141 = vdwg.mxu0
    %v1142 = vld [vmem:[%s4 + $0x5] ss:$0 sm:$0xff]
    %v1143 = vmul.f32 %v1139, %v1142
    %v1144 = vld [vmem:[#allocation6] sm:$0xff]
    %v1145 = vld [vmem:[#allocation6 + $0x18] sm:$0xff]
    %v1146 = vld [vmem:[#allocation6 + $0x30] sm:$0xff]
    %v1147 = vld [vmem:[#allocation6 + $0x48] sm:$0xff]
    %v1148 = vld [vmem:[#allocation6 + $0x60] sm:$0xff]
    %v1149 = vld [vmem:[#allocation6 + $0x78] sm:$0xff]
    %v1150 = vld [vmem:[#allocation6 + $0x90] sm:$0xff]
    %v1151 = vld [vmem:[#allocation6 + $0xa8] sm:$0xff]
    %v1152 = vld [vmem:[#allocation6 + $0xc0] sm:$0xff]
    %v1153 = vld [vmem:[#allocation6 + $0xd8] sm:$0xff]
    %v1154 = vld [vmem:[#allocation6 + $0xf0] sm:$0xff]
    %v1155 = vld [vmem:[#allocation6 + $0x108] sm:$0xff]
    %v1156 = vld [vmem:[#allocation6 + $0x120] sm:$0xff]
    %v1157 = vld [vmem:[#allocation6 + $0x138] sm:$0xff]
    %v1158 = vld [vmem:[#allocation6 + $0x150] sm:$0xff]
    %v1159 = vld [vmem:[#allocation6 + $0x168] sm:$0xff]
    %v1160 = vld [vmem:[%s4 + $0x2] ss:$0 sm:$0xff]
    %1161 = vmatprep.subr.mxu0 0.0
    %1162 = vmatpush1.msra.mxu0 %v1144
    %1163 = vmatprep.subr.mxu0 0.0
    %1164 = vmatpush1.msra.mxu0 %v1145
    %1165 = vmatprep.subr.mxu0 0.0
    %1166 = vmatpush1.msra.mxu0 %v1146
    %1167 = vmatprep.subr.mxu0 0.0
    %1168 = vmatpush1.msra.mxu0 %v1147
    %1169 = vmatprep.subr.mxu0 0.0
    %1170 = vmatpush1.msra.mxu0 %v1148
    %1171 = vmatprep.subr.mxu0 0.0
    %1172 = vmatpush1.msra.mxu0 %v1149
    %1173 = vmatprep.subr.mxu0 0.0
    %1174 = vmatpush1.msra.mxu0 %v1150
    %1175 = vmatprep.subr.mxu0 0.0
    %1176 = vmatpush1.msra.mxu0 %v1151
    %1177 = vmatprep.subr.mxu0 0.0
    %1178 = vmatpush1.msra.mxu0 %v1152
    %1179 = vmatprep.subr.mxu0 0.0
    %1180 = vmatpush1.msra.mxu0 %v1153
    %1181 = vmatprep.subr.mxu0 0.0
    %1182 = vmatpush1.msra.mxu0 %v1154
    %1183 = vmatprep.subr.mxu0 0.0
    %1184 = vmatpush1.msra.mxu0 %v1155
    %1185 = vmatprep.subr.mxu0 0.0
    %1186 = vmatpush1.msra.mxu0 %v1156
    %1187 = vmatprep.subr.mxu0 0.0
    %1188 = vmatpush1.msra.mxu0 %v1157
    %1189 = vmatprep.subr.mxu0 0.0
    %1190 = vmatpush1.msra.mxu0 %v1158
    %1191 = vmatprep.subr.mxu0 0.0
    %1192 = vmatpush1.msra.mxu0 %v1159
    %1193 = vmatprep.subr.mxu0 0.0
    %1194 = vmatpush1.msra.mxu0 0.0
    %1195 = vmatprep.subr.mxu0 0.0
    %1196 = vmatpush1.msra.mxu0 0.0
    %1197 = vmatprep.subr.mxu0 0.0
    %1198 = vmatpush1.msra.mxu0 0.0
    %1199 = vmatprep.subr.mxu0 0.0
    %1200 = vmatpush1.msra.mxu0 0.0
    %1201 = vmatprep.subr.mxu0 0.0
    %1202 = vmatpush1.msra.mxu0 0.0
    %1203 = vmatprep.subr.mxu0 0.0
    %1204 = vmatpush1.msra.mxu0 0.0
    %1205 = vmatprep.subr.mxu0 0.0
    %1206 = vmatpush1.msra.mxu0 0.0
    %1207 = vmatprep.subr.mxu0 0.0
    %1208 = vmatpush1.msra.mxu0 0.0
    %1209 = vmatprep.subr.mxu0 0.0
    %1210 = vmatpush1.msra.mxu0 0.0
    %1211 = vmatprep.subr.mxu0 0.0
    %1212 = vmatpush1.msra.mxu0 0.0
    %1213 = vmatprep.subr.mxu0 0.0
    %1214 = vmatpush1.msra.mxu0 0.0
    %1215 = vmatprep.subr.mxu0 0.0
    %1216 = vmatpush1.msra.mxu0 0.0
    %1217 = vmatprep.subr.mxu0 0.0
    %1218 = vmatpush1.msra.mxu0 0.0
    %1219 = vmatprep.subr.mxu0 0.0
    %1220 = vmatpush1.msra.mxu0 0.0
    %1221 = vmatprep.subr.mxu0 0.0
    %1222 = vmatpush1.msra.mxu0 0.0
    %1223 = vmatprep.subr.mxu0 0.0
    %1224 = vmatpush1.msra.mxu0 0.0
    %1225 = vmatprep.mubr.f32.mxu0 0.0
    %1226 = vmatmul.mubr.f32.gmra.mrb[0].mxu0 %v1143
    %v1227 = vpop.f32.mrb[0].mxu0
    %v1228 = vadd.f32 %v1160, %v1227
    %v1229 = vpop.f32.mrb[0].mxu0
    %1230 = vdwg.mxu0
    %v1231 = vmul.f32 %v1228, 0.5
    %v1232 = vrcp.pop 1.4142135
    %v1233 = vmul.f32 %v1228, %v1232
    %v1234 = verf.f32.pop %v1233
    %v1235 = vadd.f32 %v1234, 1.0
    %v1236 = vmul.f32 %v1231, %v1235
    %v1237 = vld [vmem:[#allocation6 + $0x8] sm:$0xff]
    %v1238 = vld [vmem:[#allocation6 + $0x20] sm:$0xff]
    %v1239 = vld [vmem:[#allocation6 + $0x38] sm:$0xff]
    %v1240 = vld [vmem:[#allocation6 + $0x50] sm:$0xff]
    %v1241 = vld [vmem:[#allocation6 + $0x68] sm:$0xff]
    %v1242 = vld [vmem:[#allocation6 + $0x80] sm:$0xff]
    %v1243 = vld [vmem:[#allocation6 + $0x98] sm:$0xff]
    %v1244 = vld [vmem:[#allocation6 + $0xb0] sm:$0xff]
    %v1245 = vld [vmem:[#allocation6 + $0xc8] sm:$0xff]
    %v1246 = vld [vmem:[#allocation6 + $0xe0] sm:$0xff]
    %v1247 = vld [vmem:[#allocation6 + $0xf8] sm:$0xff]
    %v1248 = vld [vmem:[#allocation6 + $0x110] sm:$0xff]
    %v1249 = vld [vmem:[#allocation6 + $0x128] sm:$0xff]
    %v1250 = vld [vmem:[#allocation6 + $0x140] sm:$0xff]
    %v1251 = vld [vmem:[#allocation6 + $0x158] sm:$0xff]
    %v1252 = vld [vmem:[#allocation6 + $0x170] sm:$0xff]
    %v1253 = vld [vmem:[%s4 + $0x3] ss:$0 sm:$0xff]
    %1254 = vmatprep.subr.mxu0 0.0
    %1255 = vmatpush1.msra.mxu0 %v1237
    %1256 = vmatprep.subr.mxu0 0.0
    %1257 = vmatpush1.msra.mxu0 %v1238
    %1258 = vmatprep.subr.mxu0 0.0
    %1259 = vmatpush1.msra.mxu0 %v1239
    %1260 = vmatprep.subr.mxu0 0.0
    %1261 = vmatpush1.msra.mxu0 %v1240
    %1262 = vmatprep.subr.mxu0 0.0
    %1263 = vmatpush1.msra.mxu0 %v1241
    %1264 = vmatprep.subr.mxu0 0.0
    %1265 = vmatpush1.msra.mxu0 %v1242
    %1266 = vmatprep.subr.mxu0 0.0
    %1267 = vmatpush1.msra.mxu0 %v1243
    %1268 = vmatprep.subr.mxu0 0.0
    %1269 = vmatpush1.msra.mxu0 %v1244
    %1270 = vmatprep.subr.mxu0 0.0
    %1271 = vmatpush1.msra.mxu0 %v1245
    %1272 = vmatprep.subr.mxu0 0.0
    %1273 = vmatpush1.msra.mxu0 %v1246
    %1274 = vmatprep.subr.mxu0 0.0
    %1275 = vmatpush1.msra.mxu0 %v1247
    %1276 = vmatprep.subr.mxu0 0.0
    %1277 = vmatpush1.msra.mxu0 %v1248
    %1278 = vmatprep.subr.mxu0 0.0
    %1279 = vmatpush1.msra.mxu0 %v1249
    %1280 = vmatprep.subr.mxu0 0.0
    %1281 = vmatpush1.msra.mxu0 %v1250
    %1282 = vmatprep.subr.mxu0 0.0
    %1283 = vmatpush1.msra.mxu0 %v1251
    %1284 = vmatprep.subr.mxu0 0.0
    %1285 = vmatpush1.msra.mxu0 %v1252
    %1286 = vmatprep.subr.mxu0 0.0
    %1287 = vmatpush1.msra.mxu0 0.0
    %1288 = vmatprep.subr.mxu0 0.0
    %1289 = vmatpush1.msra.mxu0 0.0
    %1290 = vmatprep.subr.mxu0 0.0
    %1291 = vmatpush1.msra.mxu0 0.0
    %1292 = vmatprep.subr.mxu0 0.0
    %1293 = vmatpush1.msra.mxu0 0.0
    %1294 = vmatprep.subr.mxu0 0.0
    %1295 = vmatpush1.msra.mxu0 0.0
    %1296 = vmatprep.subr.mxu0 0.0
    %1297 = vmatpush1.msra.mxu0 0.0
    %1298 = vmatprep.subr.mxu0 0.0
    %1299 = vmatpush1.msra.mxu0 0.0
    %1300 = vmatprep.subr.mxu0 0.0
    %1301 = vmatpush1.msra.mxu0 0.0
    %1302 = vmatprep.subr.mxu0 0.0
    %1303 = vmatpush1.msra.mxu0 0.0
    %1304 = vmatprep.subr.mxu0 0.0
    %1305 = vmatpush1.msra.mxu0 0.0
    %1306 = vmatprep.subr.mxu0 0.0
    %1307 = vmatpush1.msra.mxu0 0.0
    %1308 = vmatprep.subr.mxu0 0.0
    %1309 = vmatpush1.msra.mxu0 0.0
    %1310 = vmatprep.subr.mxu0 0.0
    %1311 = vmatpush1.msra.mxu0 0.0
    %1312 = vmatprep.subr.mxu0 0.0
    %1313 = vmatpush1.msra.mxu0 0.0
    %1314 = vmatprep.subr.mxu0 0.0
    %1315 = vmatpush1.msra.mxu0 0.0
    %1316 = vmatprep.subr.mxu0 0.0
    %1317 = vmatpush1.msra.mxu0 0.0
    %1318 = vmatprep.mubr.f32.mxu0 0.0
    %1319 = vmatmul.mubr.f32.gmra.mrb[0].mxu0 %v1236
    %v1320 = vpop.f32.mrb[0].mxu0
    %v1321 = vadd.f32 %v1253, %v1320
    %v1322 = vpop.f32.mrb[0].mxu0
    %1323 = vdwg.mxu0
    %v1324 = vmul.f32 %v1321, 0.5
    %v1325 = vmul.f32 %v1321, %v1232
    %v1326 = verf.f32.pop %v1325
    %v1327 = vadd.f32 %v1326, 1.0
    %v1328 = vmul.f32 %v1324, %v1327
    %v1329 = vld [vmem:[#allocation6 + $0x10] sm:$0xff]
    %v1330 = vld [vmem:[#allocation6 + $0x28] sm:$0xff]
    %v1331 = vld [vmem:[#allocation6 + $0x40] sm:$0xff]
    %v1332 = vld [vmem:[#allocation6 + $0x58] sm:$0xff]
    %v1333 = vld [vmem:[#allocation6 + $0x70] sm:$0xff]
    %v1334 = vld [vmem:[#allocation6 + $0x88] sm:$0xff]
    %v1335 = vld [vmem:[#allocation6 + $0xa0] sm:$0xff]
    %v1336 = vld [vmem:[#allocation6 + $0xb8] sm:$0xff]
    %v1337 = vld [vmem:[#allocation6 + $0xd0] sm:$0xff]
    %v1338 = vld [vmem:[#allocation6 + $0xe8] sm:$0xff]
    %v1339 = vld [vmem:[#allocation6 + $0x100] sm:$0xff]
    %v1340 = vld [vmem:[#allocation6 + $0x118] sm:$0xff]
    %v1341 = vld [vmem:[#allocation6 + $0x130] sm:$0xff]
    %v1342 = vld [vmem:[#allocation6 + $0x148] sm:$0xff]
    %v1343 = vld [vmem:[#allocation6 + $0x160] sm:$0xff]
    %v1344 = vld [vmem:[#allocation6 + $0x178] sm:$0xff]
    %v1345 = vld [vmem:[%s4 + $0x4] ss:$0 sm:$0xff]
    %1346 = vmatprep.subr.mxu0 0.0
    %1347 = vmatpush1.msra.mxu0 %v1329
    %1348 = vmatprep.subr.mxu0 0.0
    %1349 = vmatpush1.msra.mxu0 %v1330
    %1350 = vmatprep.subr.mxu0 0.0
    %1351 = vmatpush1.msra.mxu0 %v1331
    %1352 = vmatprep.subr.mxu0 0.0
    %1353 = vmatpush1.msra.mxu0 %v1332
    %1354 = vmatprep.subr.mxu0 0.0
    %1355 = vmatpush1.msra.mxu0 %v1333
    %1356 = vmatprep.subr.mxu0 0.0
    %1357 = vmatpush1.msra.mxu0 %v1334
    %1358 = vmatprep.subr.mxu0 0.0
    %1359 = vmatpush1.msra.mxu0 %v1335
    %1360 = vmatprep.subr.mxu0 0.0
    %1361 = vmatpush1.msra.mxu0 %v1336
    %1362 = vmatprep.subr.mxu0 0.0
    %1363 = vmatpush1.msra.mxu0 %v1337
    %1364 = vmatprep.subr.mxu0 0.0
    %1365 = vmatpush1.msra.mxu0 %v1338
    %1366 = vmatprep.subr.mxu0 0.0
    %1367 = vmatpush1.msra.mxu0 %v1339
    %1368 = vmatprep.subr.mxu0 0.0
    %1369 = vmatpush1.msra.mxu0 %v1340
    %1370 = vmatprep.subr.mxu0 0.0
    %1371 = vmatpush1.msra.mxu0 %v1341
    %1372 = vmatprep.subr.mxu0 0.0
    %1373 = vmatpush1.msra.mxu0 %v1342
    %1374 = vmatprep.subr.mxu0 0.0
    %1375 = vmatpush1.msra.mxu0 %v1343
    %1376 = vmatprep.subr.mxu0 0.0
    %1377 = vmatpush1.msra.mxu0 %v1344
    %1378 = vmatprep.subr.mxu0 0.0
    %1379 = vmatpush1.msra.mxu0 0.0
    %1380 = vmatprep.subr.mxu0 0.0
    %1381 = vmatpush1.msra.mxu0 0.0
    %1382 = vmatprep.subr.mxu0 0.0
    %1383 = vmatpush1.msra.mxu0 0.0
    %1384 = vmatprep.subr.mxu0 0.0
    %1385 = vmatpush1.msra.mxu0 0.0
    %1386 = vmatprep.subr.mxu0 0.0
    %1387 = vmatpush1.msra.mxu0 0.0
    %1388 = vmatprep.subr.mxu0 0.0
    %1389 = vmatpush1.msra.mxu0 0.0
    %1390 = vmatprep.subr.mxu0 0.0
    %1391 = vmatpush1.msra.mxu0 0.0
    %1392 = vmatprep.subr.mxu0 0.0
    %1393 = vmatpush1.msra.mxu0 0.0
    %1394 = vmatprep.subr.mxu0 0.0
    %1395 = vmatpush1.msra.mxu0 0.0
    %1396 = vmatprep.subr.mxu0 0.0
    %1397 = vmatpush1.msra.mxu0 0.0
    %1398 = vmatprep.subr.mxu0 0.0
    %1399 = vmatpush1.msra.mxu0 0.0
    %1400 = vmatprep.subr.mxu0 0.0
    %1401 = vmatpush1.msra.mxu0 0.0
    %1402 = vmatprep.subr.mxu0 0.0
    %1403 = vmatpush1.msra.mxu0 0.0
    %1404 = vmatprep.subr.mxu0 0.0
    %1405 = vmatpush1.msra.mxu0 0.0
    %1406 = vmatprep.subr.mxu0 0.0
    %1407 = vmatpush1.msra.mxu0 0.0
    %1408 = vmatprep.subr.mxu0 0.0
    %1409 = vmatpush1.msra.mxu0 0.0
    %1410 = vmatprep.mubr.f32.mxu0 0.0
    %1411 = vmatmul.mubr.f32.gmra.mrb[0].mxu0 %v1328
    %v1412 = vpop.f32.mrb[0].mxu0
    %v1413 = vadd.f32 %v1345, %v1412
    %v1414 = vpop.f32.mrb[0].mxu0
    %1415 = vdwg.mxu0
    %1416 = vst [vmem:[%s5] sm:$0xff] %v1413
    // Predicated region
    $region34: #{stroke_detector_forward.1} parent=1 // pred_check
      _
    $region35: #{stroke_detector_forward.1} parent=1 // pred_check_branch
      %1418 = sbr.rel (0) target = $region37
    $region36: #{stroke_detector_forward.1} parent=1 // pred_region
      _
    $region37: #{stroke_detector_forward.1} parent=1 // pred_fallthru
      _
    // Predicated region
    $region38: #{stroke_detector_forward.1} parent=1 // pred_check
      _
    $region39: #{stroke_detector_forward.1} parent=1 // pred_check_branch
      %1420 = sbr.rel (0) target = $region41
    $region40: #{stroke_detector_forward.1} parent=1 // pred_region
      _
    $region41: #{stroke_detector_forward.1} parent=1 // pred_fallthru
      _
    %1421 = vsyncpa [#allocation3], 1
    %1422 = vsyncpa [#allocation5], 1

</llo_original>
